<compile_context>
chip_gen: v7x
topology: tpu7x:2x2x1
jax: 0.10.0
libtpu: 0.0.40
codegen_flags: <defaults>
</compile_context>

<pallas_src>
import functools

import jax
import jax.numpy as jnp
from jax.experimental import pallas as pl
from jax.experimental.pallas import tpu as pltpu

_NEG_SLOPE = 0.2
_MASK_VAL = -1e9


def _round_up(x, m):
    return -(-x // m) * m


def _pick_tiling(n):
    """Dst/src tile size and padded node count (tile always a multiple of 128)."""
    if n <= 128:
        tile = 128
    elif n < 1024:
        # two dst tiles so both v7x TensorCores get work on mid-size graphs
        tile = _round_up(-(-n // 2), 128)
    else:
        tile = 512
    return tile, _round_up(n, tile)


def _vmem_budget_bytes():
    cap = 64 * 1024 * 1024
    try:
        info = pltpu.get_tpu_info()
        cap = int(getattr(info, "vmem_capacity_bytes", cap))
    except Exception:
        pass
    # ~96 MiB on 128-MiB chips (v5e/v6e), ~48 MiB on 64-MiB chips (v7x)
    return (cap * 3) // 4


def _build_attn_matrix(attn_l, attn_r, num_heads, out_feats):
    """Block-diagonal (H*D, 2H) matrix so [el | er] = feat @ A on the MXU."""
    hd = num_heads * out_feats
    a = jnp.zeros((hd, 2 * num_heads), jnp.float32)
    for h in range(num_heads):
        sl = slice(h * out_feats, (h + 1) * out_feats)
        a = a.at[sl, h].set(attn_l[h])
        a = a.at[sl, num_heads + h].set(attn_r[h])
    return a.astype(jnp.bfloat16)


# ---------------------------------------------------------------------------
# Pass 1: feature projection + per-head attention scores (two MXU matmuls).
# ---------------------------------------------------------------------------
def _proj_kernel(x_ref, w_ref, a_ref, feat_ref, elT_ref, er_ref, *, num_heads):
    # x: (T, Fin) f32, w: (Fin, H*D) bf16, a: (H*D, 2H) bf16 block-diag
    feat = jnp.dot(x_ref[...].astype(jnp.bfloat16), w_ref[...],
                   preferred_element_type=jnp.float32)            # (T, H*D) MXU
    feat_bf = feat.astype(jnp.bfloat16)
    feat_ref[...] = feat_bf
    scores = jnp.dot(feat_bf, a_ref[...],
                     preferred_element_type=jnp.float32)          # (T, 2H) MXU
    elT_ref[...] = scores[:, :num_heads].T                        # (H, T) one small transpose
    er_ref[...] = scores[:, num_heads:]                           # (T, H)


# ---------------------------------------------------------------------------
# Pass 2: masked edge softmax + neighborhood aggregation (online softmax).
# ---------------------------------------------------------------------------
def _attn_kernel(adj_ref, featS_ref, elT_ref, er_ref, b_ref, o_ref,
                 m_sc, l_sc, acc_sc, *, num_heads, out_feats, negative_slope,
                 src_tile, feat_resident):
    j = pl.program_id(1)

    @pl.when(j == 0)
    def _init():
        m_sc[...] = jnp.full_like(m_sc, _MASK_VAL)
        l_sc[...] = jnp.zeros_like(l_sc)
        acc_sc[...] = jnp.zeros_like(acc_sc)

    # Hoisted once per (i, j) tile for all heads; int8 compare, no f32 convert.
    mask_bias = jnp.where(adj_ref[...] == 0, _MASK_VAL, 0.0)      # (TD, TS) f32

    if feat_resident:
        start = pl.multiple_of(j * src_tile, src_tile)
        featS = featS_ref[pl.ds(start, src_tile), :]               # (TS, H*D) bf16
    else:
        featS = featS_ref[...]

    elT = elT_ref[...]                                             # (H, TS)
    er = er_ref[...]                                               # (TD, H)

    for h in range(num_heads):                                     # small, unrolled
        sl = slice(h * out_feats, (h + 1) * out_feats)
        e = er[:, h:h + 1] + elT[h:h + 1, :]                       # (TD, TS)
        e = jnp.where(e > 0.0, e, negative_slope * e) + mask_bias  # LeakyReLU then mask

        m_prev = m_sc[:, h:h + 1]
        m_new = jnp.maximum(m_prev, jnp.max(e, axis=1, keepdims=True))
        p = jnp.exp(e - m_new)            # masked lanes underflow / get wiped by corr
        corr = jnp.exp(m_prev - m_new)

        l_sc[:, h:h + 1] = corr * l_sc[:, h:h + 1] + jnp.sum(p, axis=1, keepdims=True)
        acc_sc[:, sl] = corr * acc_sc[:, sl] + jnp.dot(
            p.astype(jnp.bfloat16), featS[:, sl],
            preferred_element_type=jnp.float32)                    # (TD, D) MXU
        m_sc[:, h:h + 1] = m_new

    @pl.when(j == pl.num_programs(1) - 1)
    def _finalize():
        acc = acc_sc[...]
        l = jnp.maximum(l_sc[...], 1e-20)                          # guard padded rows
        cols = []
        for h in range(num_heads):
            sl = slice(h * out_feats, (h + 1) * out_feats)
            cols.append(acc[:, sl] * (1.0 / l[:, h:h + 1]))        # exact reciprocal
        rst = jnp.concatenate(cols, axis=1) + b_ref[...]           # (TD, H*D)
        o_ref[...] = jnp.where(rst > 0.0, rst, jnp.exp(rst) - 1.0)  # ELU, lane-dense store


# ---------------------------------------------------------------------------
# Cluster layer: softmax(Linear(h)) -- all heads batched in one call.
# ---------------------------------------------------------------------------
def _cluster_kernel(x_ref, w_ref, b_ref, o_ref):
    logits = jnp.dot(x_ref[...], w_ref[...],
                     preferred_element_type=jnp.float32) + b_ref[...]
    m = jnp.max(logits, axis=-1, keepdims=True)
    p = jnp.exp(logits - m)
    o_ref[...] = p * (1.0 / jnp.sum(p, axis=-1, keepdims=True))


# ---------------------------------------------------------------------------
# Wrappers
# ---------------------------------------------------------------------------
def gat_conv(x, adj_i8, w, attn_l, attn_r, bias, *, num_heads, out_feats, tile,
             negative_slope=_NEG_SLOPE):
    # x / adj_i8 are already padded so that n_pad % tile == 0.
    n_pad, fin = x.shape
    hd = num_heads * out_feats
    nt = n_pad // tile
    vmem_limit = _vmem_budget_bytes()

    w_bf = w.astype(jnp.bfloat16)                                  # pre-cast constants
    a_bf = _build_attn_matrix(attn_l, attn_r, num_heads, out_feats)

    feat_bf16, el_t, er = pl.pallas_call(
        functools.partial(_proj_kernel, num_heads=num_heads),
        grid=(nt,),
        in_specs=[
            pl.BlockSpec((tile, fin), lambda i: (i, 0)),
            pl.BlockSpec((fin, hd), lambda i: (0, 0)),
            pl.BlockSpec((hd, 2 * num_heads), lambda i: (0, 0)),
        ],
        out_specs=(
            pl.BlockSpec((tile, hd), lambda i: (i, 0)),            # feat (bf16)
            pl.BlockSpec((num_heads, tile), lambda i: (0, i)),     # el^T (lane-dense)
            pl.BlockSpec((tile, num_heads), lambda i: (i, 0)),     # er
        ),
        out_shape=(
            jax.ShapeDtypeStruct((n_pad, hd), jnp.bfloat16),
            jax.ShapeDtypeStruct((num_heads, n_pad), jnp.float32),
            jax.ShapeDtypeStruct((n_pad, num_heads), jnp.float32),
        ),
        compiler_params=pltpu.CompilerParams(
            dimension_semantics=("parallel",),
            vmem_limit_bytes=vmem_limit),
    )(x, w_bf, a_bf)

    # Keep projected features fully VMEM-resident across dst tiles when they fit
    # (constant index map => loaded once); otherwise stream per src tile.
    feat_bytes = n_pad * hd * 2
    feat_resident = 2 * feat_bytes <= vmem_limit // 3
    if feat_resident:
        feat_spec = pl.BlockSpec((n_pad, hd), lambda i, j: (0, 0))
    else:
        feat_spec = pl.BlockSpec((tile, hd), lambda i, j: (j, 0))

    out = pl.pallas_call(
        functools.partial(_attn_kernel, num_heads=num_heads, out_feats=out_feats,
                          negative_slope=negative_slope, src_tile=tile,
                          feat_resident=feat_resident),
        grid=(nt, nt),
        in_specs=[
            pl.BlockSpec((tile, tile), lambda i, j: (i, j)),       # adj (int8)
            feat_spec,                                             # feat (src rows)
            pl.BlockSpec((num_heads, tile), lambda i, j: (0, j)),  # el^T (src)
            pl.BlockSpec((tile, num_heads), lambda i, j: (i, 0)),  # er (dst)
            pl.BlockSpec((1, hd), lambda i, j: (0, 0)),            # bias
        ],
        out_specs=pl.BlockSpec((tile, hd), lambda i, j: (i, 0)),
        out_shape=jax.ShapeDtypeStruct((n_pad, hd), jnp.float32),
        scratch_shapes=[
            pltpu.VMEM((tile, num_heads), jnp.float32),  # running max m
            pltpu.VMEM((tile, num_heads), jnp.float32),  # running sum l
            pltpu.VMEM((tile, hd), jnp.float32),         # accumulator
        ],
        compiler_params=pltpu.CompilerParams(
            dimension_semantics=("parallel", "arbitrary"),
            vmem_limit_bytes=vmem_limit),
    )(adj_i8, feat_bf16, el_t, er, bias)
    return out.reshape(n_pad, num_heads, out_feats)


def cluster_forward(h_heads, w, b):
    # h_heads: (H, N, D) -> one batched call over all heads' rows.
    num_h, n, d = h_heads.shape
    c = w.shape[1]
    rows = num_h * n
    hs = h_heads.reshape(rows, d)
    if rows >= 1024:
        tile = 512
        rows_pad = _round_up(rows, tile)
        if rows_pad != rows:
            hs = jnp.pad(hs, ((0, rows_pad - rows), (0, 0)))
    else:
        tile = rows
        rows_pad = rows
    out = pl.pallas_call(
        _cluster_kernel,
        grid=(rows_pad // tile,),
        in_specs=[
            pl.BlockSpec((tile, d), lambda i: (i, 0)),
            pl.BlockSpec((d, c), lambda i: (0, 0)),
            pl.BlockSpec((1, c), lambda i: (0, 0)),
        ],
        out_specs=pl.BlockSpec((tile, c), lambda i: (i, 0)),
        out_shape=jax.ShapeDtypeStruct((rows_pad, c), jnp.float32),
        compiler_params=pltpu.CompilerParams(
            dimension_semantics=("parallel",),
            vmem_limit_bytes=_vmem_budget_bytes()),
    )(hs, w, b)
    return out[:rows].reshape(num_h, n, c)


def gat_forward(inputs, adj_i8, params, *, num_layers, heads, num_hidden):
    # TODO(synk): feat_drop / attn_drop are set to 0 (deterministic forward);
    # dropout masks are not generated.
    # Precondition: every node has at least one in-neighbor (e.g. self-loops),
    # matching DGL GATConv's zero-in-degree requirement.
    n = inputs.shape[0]
    tile, n_pad = _pick_tiling(n)
    pad = n_pad - n
    h = jnp.pad(inputs, ((0, pad), (0, 0))) if pad else inputs
    adj = jnp.pad(adj_i8, ((0, pad), (0, pad))) if pad else adj_i8

    for l in range(num_layers):
        temp = h.reshape(h.shape[0], -1)  # torch .flatten(1)
        p = params["gat"][l]
        h = gat_conv(temp, adj, p["w"], p["attn_l"], p["attn_r"], p["bias"],
                     num_heads=heads[l], out_feats=num_hidden, tile=tile)
    h = h[:n]                                             # drop padded rows

    # Replicate the reference's use of cluster[l] with l = num_layers - 1.
    cp = params["cluster"][num_layers - 1]
    h_heads = jnp.transpose(h, (1, 0, 2))                 # (H, N, D)
    cs_all = cluster_forward(h_heads, cp["w"], cp["b"])   # (H, N, C)
    heads_out = [h[:, i] for i in range(h.shape[1])]
    cs = [cs_all[i] for i in range(h.shape[1])]
    return heads_out, cs


def init_params(key, *, in_dim, num_hidden, heads, num_layers, n_clusters):
    params = {"gat": [], "cluster": []}
    dims_in = in_dim
    for l in range(num_layers):
        key, k1, k2, k3 = jax.random.split(key, 4)
        hd = heads[l] * num_hidden
        params["gat"].append({
            "w": 0.1 * jax.random.normal(k1, (dims_in, hd), jnp.float32),
            "attn_l": 0.1 * jax.random.normal(k2, (heads[l], num_hidden), jnp.float32),
            "attn_r": 0.1 * jax.random.normal(k3, (heads[l], num_hidden), jnp.float32),
            "bias": jnp.zeros((1, hd), jnp.float32),
        })
        dims_in = heads[l] * num_hidden
    for _ in range(heads[0]):
        key, k1, k2 = jax.random.split(key, 3)
        params["cluster"].append({
            "w": 0.1 * jax.random.normal(k1, (num_hidden, n_clusters), jnp.float32),
            "b": 0.01 * jax.random.normal(k2, (1, n_clusters), jnp.float32),
        })
    return params


if __name__ == "__main__":
    N, in_dim, num_hidden, n_clusters = 16, 8, 8, 4
    num_layers = 2
    heads = [2, 2]

    key = jax.random.PRNGKey(0)
    key, kx, kp = jax.random.split(key, 3)

    # Node features (N, in_dim)
    x = jax.random.normal(kx, (N, in_dim), jnp.float32)

    # Deterministic graph: ring with self loops (dense adjacency mask, dst x src)
    idx = jnp.arange(N)
    adj = jnp.zeros((N, N), jnp.int8)
    adj = adj.at[idx, idx].set(1)
    adj = adj.at[idx, (idx + 1) % N].set(1)
    adj = adj.at[idx, (idx - 1) % N].set(1)

    params = init_params(kp, in_dim=in_dim, num_hidden=num_hidden, heads=heads,
                         num_layers=num_layers, n_clusters=n_clusters)

    heads_out, cs = gat_forward(x, adj, params, num_layers=num_layers,
                                heads=heads, num_hidden=num_hidden)

    for t in heads_out + cs:
        jax.block_until_ready(t)

    assert len(heads_out) == heads[-1] and len(cs) == heads[-1]
    assert heads_out[0].shape == (N, num_hidden)
    assert cs[0].shape == (N, n_clusters)
    assert all(bool(jnp.all(jnp.isfinite(t))) for t in heads_out + cs)
    print("KERNEL_OK")
</pallas_src>

<mosaic_0001>
module attributes {stable_mosaic.version = 11 : i64} {
  func.func @_proj_kernel(%arg0: i32, %arg1: memref<128x8xf32, #tpu.memory_space<vmem>>, %arg2: memref<8x16xbf16, #tpu.memory_space<vmem>>, %arg3: memref<16x4xbf16, #tpu.memory_space<vmem>>, %arg4: memref<128x16xbf16, #tpu.memory_space<vmem>>, %arg5: memref<2x128xf32, #tpu.memory_space<vmem>>, %arg6: memref<128x2xf32, #tpu.memory_space<vmem>>) attributes {dimension_semantics = [#tpu.dimension_semantics<parallel>], iteration_bounds = array<i64: 1>, scalar_prefetch = 0 : i64, scratch_operands = 0 : i64, tpu.core_type = #tpu.core_type<tc>, window_params = [{transform_indices = @transform_0, window_bounds = array<i64: 128, 8>}, {pipeline_mode = #tpu.pipeline_mode<synchronous>, transform_indices = @transform_1, window_bounds = array<i64: 8, 16>}, {pipeline_mode = #tpu.pipeline_mode<synchronous>, transform_indices = @transform_2, window_bounds = array<i64: 16, 4>}, {transform_indices = @transform_3, window_bounds = array<i64: 128, 16>}, {transform_indices = @transform_4, window_bounds = array<i64: 2, 128>}, {transform_indices = @transform_5, window_bounds = array<i64: 128, 2>}]} {
    %c0 = arith.constant 0 : index
    %c0_0 = arith.constant 0 : index
    %0 = vector.load %arg1[%c0, %c0_0] : memref<128x8xf32, #tpu.memory_space<vmem>>, vector<128x8xf32>
    %1 = arith.truncf %0 : vector<128x8xf32> to vector<128x8xbf16>
    %c0_1 = arith.constant 0 : index
    %c0_2 = arith.constant 0 : index
    %2 = vector.load %arg2[%c0_1, %c0_2] : memref<8x16xbf16, #tpu.memory_space<vmem>>, vector<8x16xbf16>
    %cst = arith.constant dense<0.000000e+00> : vector<128x16xf32>
    %3 = tpu.matmul %1, %2, %cst {dimension_numbers = #tpu.dot_dimension_numbers<[1], [0], [0], [1], [0, 0, 1, 1], [], []>} : vector<128x8xbf16>, vector<8x16xbf16>, vector<128x16xf32> -> vector<128x16xf32>
    %4 = arith.truncf %3 : vector<128x16xf32> to vector<128x16xbf16>
    %c0_3 = arith.constant 0 : index
    %c0_4 = arith.constant 0 : index
    %5 = vector.load %arg4[%c0_3, %c0_4] : memref<128x16xbf16, #tpu.memory_space<vmem>>, vector<128x16xbf16>
    tpu.vector_store %arg4[%c0_3, %c0_4], %4 {strides = array<i32>} : memref<128x16xbf16, #tpu.memory_space<vmem>>, vector<128x16xbf16>,
    %c0_5 = arith.constant 0 : index
    %c0_6 = arith.constant 0 : index
    %6 = vector.load %arg3[%c0_5, %c0_6] : memref<16x4xbf16, #tpu.memory_space<vmem>>, vector<16x4xbf16>
    %cst_7 = arith.constant dense<0.000000e+00> : vector<128x4xf32>
    %7 = tpu.matmul %4, %6, %cst_7 {dimension_numbers = #tpu.dot_dimension_numbers<[1], [0], [0], [1], [0, 0, 1, 1], [], []>} : vector<128x16xbf16>, vector<16x4xbf16>, vector<128x4xf32> -> vector<128x4xf32>
    %8 = vector.extract_strided_slice %7 {offsets = [0, 0], sizes = [128, 2], strides = [1, 1]} : vector<128x4xf32> to vector<128x2xf32>
    %9 = tpu.transpose %8, [1, 0] : vector<128x2xf32> -> vector<2x128xf32>
    %c0_8 = arith.constant 0 : index
    %c0_9 = arith.constant 0 : index
    %10 = vector.load %arg5[%c0_8, %c0_9] : memref<2x128xf32, #tpu.memory_space<vmem>>, vector<2x128xf32>
    tpu.vector_store %arg5[%c0_8, %c0_9], %9 {strides = array<i32>} : memref<2x128xf32, #tpu.memory_space<vmem>>, vector<2x128xf32>,
    %11 = vector.extract_strided_slice %7 {offsets = [0, 2], sizes = [128, 2], strides = [1, 1]} : vector<128x4xf32> to vector<128x2xf32>
    %c0_10 = arith.constant 0 : index
    %c0_11 = arith.constant 0 : index
    %12 = vector.load %arg6[%c0_10, %c0_11] : memref<128x2xf32, #tpu.memory_space<vmem>>, vector<128x2xf32>
    tpu.vector_store %arg6[%c0_10, %c0_11], %11 {strides = array<i32>} : memref<128x2xf32, #tpu.memory_space<vmem>>, vector<128x2xf32>,
    return
  }
  func.func @transform_0(%arg0: i32) -> (i32, i32) {
    %c0_i32 = arith.constant 0 : i32
    %c0_i32_0 = arith.constant 0 : i32
    return %arg0, %c0_i32 : i32, i32
  }
  func.func @transform_1(%arg0: i32) -> (i32, i32) {
    %c0_i32 = arith.constant 0 : i32
    %c0_i32_0 = arith.constant 0 : i32
    %c0_i32_1 = arith.constant 0 : i32
    return %c0_i32, %c0_i32_0 : i32, i32
  }
  func.func @transform_2(%arg0: i32) -> (i32, i32) {
    %c0_i32 = arith.constant 0 : i32
    %c0_i32_0 = arith.constant 0 : i32
    %c0_i32_1 = arith.constant 0 : i32
    return %c0_i32, %c0_i32_0 : i32, i32
  }
  func.func @transform_3(%arg0: i32) -> (i32, i32) {
    %c0_i32 = arith.constant 0 : i32
    %c0_i32_0 = arith.constant 0 : i32
    return %arg0, %c0_i32 : i32, i32
  }
  func.func @transform_4(%arg0: i32) -> (i32, i32) {
    %c0_i32 = arith.constant 0 : i32
    %c0_i32_0 = arith.constant 0 : i32
    return %c0_i32, %arg0 : i32, i32
  }
  func.func @transform_5(%arg0: i32) -> (i32, i32) {
    %c0_i32 = arith.constant 0 : i32
    %c0_i32_0 = arith.constant 0 : i32
    return %arg0, %c0_i32 : i32, i32
  }
}

</mosaic_0001>

<llo_original>
// kernel: tpu_custom_call.1
$region0: #{tpu_custom_call.1}
  #allocation0 [shape = 'u32[]', space=smem, size = 0x4, offset = 0x4, fixed_abs, tag = 'smem constant byte address 0x4 - core index']
  #allocation1 [shape = 'u32[144,128]{1,0:T(1,128)}', space=vmem, size = 0x12000, scoped, tag = 'internal scratch']
  %s0 = inlined_call_operand.vmem [shape: f32[128,8], index: 0, kind: input, shape index: {}]
  %s1 = inlined_call_operand.vmem [shape: bf16[8,16], index: 1, kind: input, shape index: {}]
  %s2 = inlined_call_operand.vmem [shape: bf16[16,4], index: 2, kind: input, shape index: {}]
  %s3 = inlined_call_operand.vmem [shape: bf16[128,16], index: 3, kind: output, shape index: {0}]
  %s4 = inlined_call_operand.hbm [shape: f32[2,128], index: 4, kind: output, shape index: {1}]
  %s5 = inlined_call_operand.vmem [shape: f32[128,2], index: 5, kind: output, shape index: {2}]
  %6 = xla_tuple %s3, %s4, %s5
  %s7 = sld [smem:[#allocation0]]
  $region38: #{tpu_custom_call.1} parent=0
    _
  %s9 = ssub.s32 1, %s7
  %s10 = scalar_select 0, %s9, %s7
  $region1: #{tpu_custom_call.1} parent=0
    #allocation2 [shape = 'u8[1024]{0}', space=vmem, size = 0x400, scoped, tag = 'output window, operand 1, single buffered']
    #allocation3 [shape = 's32[1]{0}', space=sflag, size = 0x4, scoped, tag = 'scoped memory for tpu_custom_call.1']
    %11 = vsyncpa [#allocation3], 0
    // Predicated region
    $region2: #{tpu_custom_call.1} parent=1 // pred_check
      _
    $region3: #{tpu_custom_call.1} parent=1 // pred_check_branch
      %13 = sbr.rel (0) target = $region5
    $region4: #{tpu_custom_call.1} parent=1 // pred_region
      _
    $region5: #{tpu_custom_call.1} parent=1 // pred_fallthru
      _
    // Predicated region
    $region6: #{tpu_custom_call.1} parent=1 // pred_check
      _
    $region7: #{tpu_custom_call.1} parent=1 // pred_check_branch
      %15 = sbr.rel (0) target = $region9
    $region8: #{tpu_custom_call.1} parent=1 // pred_region
      _
    $region9: #{tpu_custom_call.1} parent=1 // pred_fallthru
      _
    // Predicated region
    $region10: #{tpu_custom_call.1} parent=1 // pred_check
      _
    $region11: #{tpu_custom_call.1} parent=1 // pred_check_branch
      %17 = sbr.rel (0) target = $region13
    $region12: #{tpu_custom_call.1} parent=1 // pred_region
      _
    $region13: #{tpu_custom_call.1} parent=1 // pred_fallthru
      _
    %v19 = vld [vmem:[%s0] sm:$0xff]
    %v20 = vld [vmem:[%s0 + $0x8] sm:$0xff]
    %v21 = vld [vmem:[%s0 + $0x10] sm:$0xff]
    %v22 = vld [vmem:[%s0 + $0x18] sm:$0xff]
    %v23 = vld [vmem:[%s0 + $0x20] sm:$0xff]
    %v24 = vld [vmem:[%s0 + $0x28] sm:$0xff]
    %v25 = vld [vmem:[%s0 + $0x30] sm:$0xff]
    %v26 = vld [vmem:[%s0 + $0x38] sm:$0xff]
    %v27 = vld [vmem:[%s0 + $0x40] sm:$0xff]
    %v28 = vld [vmem:[%s0 + $0x48] sm:$0xff]
    %v29 = vld [vmem:[%s0 + $0x50] sm:$0xff]
    %v30 = vld [vmem:[%s0 + $0x58] sm:$0xff]
    %v31 = vld [vmem:[%s0 + $0x60] sm:$0xff]
    %v32 = vld [vmem:[%s0 + $0x68] sm:$0xff]
    %v33 = vld [vmem:[%s0 + $0x70] sm:$0xff]
    %v34 = vld [vmem:[%s0 + $0x78] sm:$0xff]
    %v35 = vpack.c.bf16 %v20, %v19
    %v36 = vpack.c.bf16 %v22, %v21
    %v37 = vpack.c.bf16 %v24, %v23
    %v38 = vpack.c.bf16 %v26, %v25
    %v39 = vpack.c.bf16 %v28, %v27
    %v40 = vpack.c.bf16 %v30, %v29
    %v41 = vpack.c.bf16 %v32, %v31
    %v42 = vpack.c.bf16 %v34, %v33
    %v43 = vld [vmem:[%s1] sm:$0xf]
    %vm44 = vcmask 64512
    %v46 = vsel %vm44, %v35, 0
    %v49 = vsel %vm44, %v36, 0
    %v52 = vsel %vm44, %v37, 0
    %v55 = vsel %vm44, %v38, 0
    %v58 = vsel %vm44, %v39, 0
    %v61 = vsel %vm44, %v40, 0
    %v64 = vsel %vm44, %v41, 0
    %v67 = vsel %vm44, %v42, 0
    %vm69 = vcmask 1043456
    %v71 = vsel %vm69, %v43, 0
    %73 = vmatprep.subr.bf16.mxu0 0
    %74 = vmatpush1.bf16.msra.mxu0 %v71
    %75 = vmatprep.subr.bf16.mxu0 0
    %76 = vmatpush1.bf16.msra.mxu0 0
    %77 = vmatprep.subr.bf16.mxu0 0
    %78 = vmatpush1.bf16.msra.mxu0 0
    %79 = vmatprep.subr.bf16.mxu0 0
    %80 = vmatpush1.bf16.msra.mxu0 0
    %81 = vmatprep.subr.bf16.mxu0 0
    %82 = vmatpush1.bf16.msra.mxu0 0
    %83 = vmatprep.subr.bf16.mxu0 0
    %84 = vmatpush1.bf16.msra.mxu0 0
    %85 = vmatprep.subr.bf16.mxu0 0
    %86 = vmatpush1.bf16.msra.mxu0 0
    %87 = vmatprep.subr.bf16.mxu0 0
    %88 = vmatpush1.bf16.msra.mxu0 0
    %89 = vmatprep.subr.bf16.mxu0 0
    %90 = vmatpush1.bf16.msra.mxu0 0
    %91 = vmatprep.subr.bf16.mxu0 0
    %92 = vmatpush1.bf16.msra.mxu0 0
    %93 = vmatprep.subr.bf16.mxu0 0
    %94 = vmatpush1.bf16.msra.mxu0 0
    %95 = vmatprep.subr.bf16.mxu0 0
    %96 = vmatpush1.bf16.msra.mxu0 0
    %97 = vmatprep.subr.bf16.mxu0 0
    %98 = vmatpush1.bf16.msra.mxu0 0
    %99 = vmatprep.subr.bf16.mxu0 0
    %100 = vmatpush1.bf16.msra.mxu0 0
    %101 = vmatprep.subr.bf16.mxu0 0
    %102 = vmatpush1.bf16.msra.mxu0 0
    %103 = vmatprep.subr.bf16.mxu0 0
    %104 = vmatpush1.bf16.msra.mxu0 0
    %105 = vmatprep.mubr.bf16.mxu0 0
    %106 = vmatmul.mubr.bf16.gmra.mrb[0].mxu0 %v46
    %v107 = vpop.f32.mrb[0].mxu0
    %v108 = vadd.f32 0.0, %v107
    %v109 = vpop.f32.mrb[0].mxu0
    %v110 = vpop.f32.mrb[0].mxu0
    %v111 = vadd.f32 0.0, %v110
    %v112 = vpop.f32.mrb[0].mxu0
    %113 = vmatprep.mubr.bf16.mxu0 0
    %114 = vmatmul.mubr.bf16.gmra.mrb[0].mxu0 %v49
    %v115 = vpop.f32.mrb[0].mxu0
    %v116 = vadd.f32 0.0, %v115
    %v117 = vpop.f32.mrb[0].mxu0
    %v118 = vpop.f32.mrb[0].mxu0
    %v119 = vadd.f32 0.0, %v118
    %v120 = vpop.f32.mrb[0].mxu0
    %121 = vmatprep.mubr.bf16.mxu0 0
    %122 = vmatmul.mubr.bf16.gmra.mrb[0].mxu0 %v52
    %v123 = vpop.f32.mrb[0].mxu0
    %v124 = vadd.f32 0.0, %v123
    %v125 = vpop.f32.mrb[0].mxu0
    %v126 = vpop.f32.mrb[0].mxu0
    %v127 = vadd.f32 0.0, %v126
    %v128 = vpop.f32.mrb[0].mxu0
    %129 = vmatprep.mubr.bf16.mxu0 0
    %130 = vmatmul.mubr.bf16.gmra.mrb[0].mxu0 %v55
    %v131 = vpop.f32.mrb[0].mxu0
    %v132 = vadd.f32 0.0, %v131
    %v133 = vpop.f32.mrb[0].mxu0
    %v134 = vpop.f32.mrb[0].mxu0
    %v135 = vadd.f32 0.0, %v134
    %v136 = vpop.f32.mrb[0].mxu0
    %137 = vmatprep.mubr.bf16.mxu0 0
    %138 = vmatmul.mubr.bf16.gmra.mrb[0].mxu0 %v58
    %v139 = vpop.f32.mrb[0].mxu0
    %v140 = vadd.f32 0.0, %v139
    %v141 = vpop.f32.mrb[0].mxu0
    %v142 = vpop.f32.mrb[0].mxu0
    %v143 = vadd.f32 0.0, %v142
    %v144 = vpop.f32.mrb[0].mxu0
    %145 = vmatprep.mubr.bf16.mxu0 0
    %146 = vmatmul.mubr.bf16.gmra.mrb[0].mxu0 %v61
    %v147 = vpop.f32.mrb[0].mxu0
    %v148 = vadd.f32 0.0, %v147
    %v149 = vpop.f32.mrb[0].mxu0
    %v150 = vpop.f32.mrb[0].mxu0
    %v151 = vadd.f32 0.0, %v150
    %v152 = vpop.f32.mrb[0].mxu0
    %153 = vmatprep.mubr.bf16.mxu0 0
    %154 = vmatmul.mubr.bf16.gmra.mrb[0].mxu0 %v64
    %v155 = vpop.f32.mrb[0].mxu0
    %v156 = vadd.f32 0.0, %v155
    %v157 = vpop.f32.mrb[0].mxu0
    %v158 = vpop.f32.mrb[0].mxu0
    %v159 = vadd.f32 0.0, %v158
    %v160 = vpop.f32.mrb[0].mxu0
    %161 = vmatprep.mubr.bf16.mxu0 0
    %162 = vmatmul.mubr.bf16.gmra.mrb[0].mxu0 %v67
    %v163 = vpop.f32.mrb[0].mxu0
    %v164 = vadd.f32 0.0, %v163
    %v165 = vpop.f32.mrb[0].mxu0
    %v166 = vpop.f32.mrb[0].mxu0
    %v167 = vadd.f32 0.0, %v166
    %v168 = vpop.f32.mrb[0].mxu0
    %169 = vdwg.mxu0
    %v170 = vpack.c.bf16 %v111, %v108
    %v171 = vpack.c.bf16 %v119, %v116
    %v172 = vpack.c.bf16 %v127, %v124
    %v173 = vpack.c.bf16 %v135, %v132
    %v174 = vpack.c.bf16 %v143, %v140
    %v175 = vpack.c.bf16 %v151, %v148
    %v176 = vpack.c.bf16 %v159, %v156
    %v177 = vpack.c.bf16 %v167, %v164
    %v186 = vunpack.c.l.b16 %v170
    %v187 = vunpack.c.h.b16 %v170
    %v188 = vunpack.c.l.b16 %v171
    %v189 = vunpack.c.h.b16 %v171
    %v190 = vunpack.c.l.b16 %v172
    %v191 = vunpack.c.h.b16 %v172
    %v192 = vunpack.c.l.b16 %v173
    %v193 = vunpack.c.h.b16 %v173
    %v194 = vunpack.c.l.b16 %v174
    %v195 = vunpack.c.h.b16 %v174
    %v196 = vunpack.c.l.b16 %v175
    %v197 = vunpack.c.h.b16 %v175
    %v198 = vunpack.c.l.b16 %v176
    %v199 = vunpack.c.h.b16 %v176
    %v200 = vunpack.c.l.b16 %v177
    %v201 = vunpack.c.h.b16 %v177
    %v202 = vpack.c.b16 %v186, %v186
    %v203 = vpack.c.b16 %v187, %v187
    %v204 = vpack.c.b16 %v188, %v188
    %v205 = vpack.c.b16 %v189, %v189
    %v206 = vpack.c.b16 %v190, %v190
    %v207 = vpack.c.b16 %v191, %v191
    %v208 = vpack.c.b16 %v192, %v192
    %v209 = vpack.c.b16 %v193, %v193
    %v210 = vpack.c.b16 %v194, %v194
    %v211 = vpack.c.b16 %v195, %v195
    %v212 = vpack.c.b16 %v196, %v196
    %v213 = vpack.c.b16 %v197, %v197
    %v214 = vpack.c.b16 %v198, %v198
    %v215 = vpack.c.b16 %v199, %v199
    %v216 = vpack.c.b16 %v200, %v200
    %v217 = vpack.c.b16 %v201, %v201
    %vm234 = vcmask 125952
    %235 = vst.msk [vmem:[%s3] sm:$0xf] %vm234, %v202
    %236 = vst.msk [vmem:[%s3 + $0x4] sm:$0xf] %vm234, %v203
    %237 = vst.msk [vmem:[%s3 + $0x8] sm:$0xf] %vm234, %v204
    %238 = vst.msk [vmem:[%s3 + $0xc] sm:$0xf] %vm234, %v205
    %239 = vst.msk [vmem:[%s3 + $0x10] sm:$0xf] %vm234, %v206
    %240 = vst.msk [vmem:[%s3 + $0x14] sm:$0xf] %vm234, %v207
    %241 = vst.msk [vmem:[%s3 + $0x18] sm:$0xf] %vm234, %v208
    %242 = vst.msk [vmem:[%s3 + $0x1c] sm:$0xf] %vm234, %v209
    %243 = vst.msk [vmem:[%s3 + $0x20] sm:$0xf] %vm234, %v210
    %244 = vst.msk [vmem:[%s3 + $0x24] sm:$0xf] %vm234, %v211
    %245 = vst.msk [vmem:[%s3 + $0x28] sm:$0xf] %vm234, %v212
    %246 = vst.msk [vmem:[%s3 + $0x2c] sm:$0xf] %vm234, %v213
    %247 = vst.msk [vmem:[%s3 + $0x30] sm:$0xf] %vm234, %v214
    %248 = vst.msk [vmem:[%s3 + $0x34] sm:$0xf] %vm234, %v215
    %249 = vst.msk [vmem:[%s3 + $0x38] sm:$0xf] %vm234, %v216
    %250 = vst.msk [vmem:[%s3 + $0x3c] sm:$0xf] %vm234, %v217
    %v251 = vld [vmem:[%s2] sm:$0xf]
    %v252 = vld [vmem:[%s2 + $0x4] sm:$0xf]
    %v255 = vunpack.c.l.b16 %v251
    %v256 = vunpack.c.l.b16 %v252
    %v257 = vpack.c.b16 %v256, %v255
    %vm259 = vcmask 130048
    %v261 = vsel %vm259, %v170, 0
    %v264 = vsel %vm259, %v171, 0
    %v267 = vsel %vm259, %v172, 0
    %v270 = vsel %vm259, %v173, 0
    %v273 = vsel %vm259, %v174, 0
    %v276 = vsel %vm259, %v175, 0
    %v279 = vsel %vm259, %v176, 0
    %v282 = vsel %vm259, %v177, 0
    %284 = vmatprep.subr.bf16.mxu0 0
    %285 = vmatpush1.bf16.msra.mxu0 %v257
    %286 = vmatprep.subr.bf16.mxu0 0
    %287 = vmatpush1.bf16.msra.mxu0 0
    %288 = vmatprep.subr.bf16.mxu0 0
    %289 = vmatpush1.bf16.msra.mxu0 0
    %290 = vmatprep.subr.bf16.mxu0 0
    %291 = vmatpush1.bf16.msra.mxu0 0
    %292 = vmatprep.subr.bf16.mxu0 0
    %293 = vmatpush1.bf16.msra.mxu0 0
    %294 = vmatprep.subr.bf16.mxu0 0
    %295 = vmatpush1.bf16.msra.mxu0 0
    %296 = vmatprep.subr.bf16.mxu0 0
    %297 = vmatpush1.bf16.msra.mxu0 0
    %298 = vmatprep.subr.bf16.mxu0 0
    %299 = vmatpush1.bf16.msra.mxu0 0
    %300 = vmatprep.subr.bf16.mxu0 0
    %301 = vmatpush1.bf16.msra.mxu0 0
    %302 = vmatprep.subr.bf16.mxu0 0
    %303 = vmatpush1.bf16.msra.mxu0 0
    %304 = vmatprep.subr.bf16.mxu0 0
    %305 = vmatpush1.bf16.msra.mxu0 0
    %306 = vmatprep.subr.bf16.mxu0 0
    %307 = vmatpush1.bf16.msra.mxu0 0
    %308 = vmatprep.subr.bf16.mxu0 0
    %309 = vmatpush1.bf16.msra.mxu0 0
    %310 = vmatprep.subr.bf16.mxu0 0
    %311 = vmatpush1.bf16.msra.mxu0 0
    %312 = vmatprep.subr.bf16.mxu0 0
    %313 = vmatpush1.bf16.msra.mxu0 0
    %314 = vmatprep.subr.bf16.mxu0 0
    %315 = vmatpush1.bf16.msra.mxu0 0
    %316 = vmatprep.mubr.bf16.mxu0 0
    %317 = vmatmul.mubr.bf16.gmra.mrb[0].mxu0 %v261
    %v318 = vpop.f32.mrb[0].mxu0
    %v319 = vadd.f32 0.0, %v318
    %v320 = vpop.f32.mrb[0].mxu0
    %v321 = vpop.f32.mrb[0].mxu0
    %v322 = vadd.f32 0.0, %v321
    %v323 = vpop.f32.mrb[0].mxu0
    %324 = vmatprep.mubr.bf16.mxu0 0
    %325 = vmatmul.mubr.bf16.gmra.mrb[0].mxu0 %v264
    %v326 = vpop.f32.mrb[0].mxu0
    %v327 = vadd.f32 0.0, %v326
    %v328 = vpop.f32.mrb[0].mxu0
    %v329 = vpop.f32.mrb[0].mxu0
    %v330 = vadd.f32 0.0, %v329
    %v331 = vpop.f32.mrb[0].mxu0
    %332 = vmatprep.mubr.bf16.mxu0 0
    %333 = vmatmul.mubr.bf16.gmra.mrb[0].mxu0 %v267
    %v334 = vpop.f32.mrb[0].mxu0
    %v335 = vadd.f32 0.0, %v334
    %v336 = vpop.f32.mrb[0].mxu0
    %v337 = vpop.f32.mrb[0].mxu0
    %v338 = vadd.f32 0.0, %v337
    %v339 = vpop.f32.mrb[0].mxu0
    %340 = vmatprep.mubr.bf16.mxu0 0
    %341 = vmatmul.mubr.bf16.gmra.mrb[0].mxu0 %v270
    %v342 = vpop.f32.mrb[0].mxu0
    %v343 = vadd.f32 0.0, %v342
    %v344 = vpop.f32.mrb[0].mxu0
    %v345 = vpop.f32.mrb[0].mxu0
    %v346 = vadd.f32 0.0, %v345
    %v347 = vpop.f32.mrb[0].mxu0
    %348 = vmatprep.mubr.bf16.mxu0 0
    %349 = vmatmul.mubr.bf16.gmra.mrb[0].mxu0 %v273
    %v350 = vpop.f32.mrb[0].mxu0
    %v351 = vadd.f32 0.0, %v350
    %v352 = vpop.f32.mrb[0].mxu0
    %v353 = vpop.f32.mrb[0].mxu0
    %v354 = vadd.f32 0.0, %v353
    %v355 = vpop.f32.mrb[0].mxu0
    %356 = vmatprep.mubr.bf16.mxu0 0
    %357 = vmatmul.mubr.bf16.gmra.mrb[0].mxu0 %v276
    %v358 = vpop.f32.mrb[0].mxu0
    %v359 = vadd.f32 0.0, %v358
    %v360 = vpop.f32.mrb[0].mxu0
    %v361 = vpop.f32.mrb[0].mxu0
    %v362 = vadd.f32 0.0, %v361
    %v363 = vpop.f32.mrb[0].mxu0
    %364 = vmatprep.mubr.bf16.mxu0 0
    %365 = vmatmul.mubr.bf16.gmra.mrb[0].mxu0 %v279
    %v366 = vpop.f32.mrb[0].mxu0
    %v367 = vadd.f32 0.0, %v366
    %v368 = vpop.f32.mrb[0].mxu0
    %v369 = vpop.f32.mrb[0].mxu0
    %v370 = vadd.f32 0.0, %v369
    %v371 = vpop.f32.mrb[0].mxu0
    %372 = vmatprep.mubr.bf16.mxu0 0
    %373 = vmatmul.mubr.bf16.gmra.mrb[0].mxu0 %v282
    %v374 = vpop.f32.mrb[0].mxu0
    %v375 = vadd.f32 0.0, %v374
    %v376 = vpop.f32.mrb[0].mxu0
    %v377 = vpop.f32.mrb[0].mxu0
    %v378 = vadd.f32 0.0, %v377
    %v379 = vpop.f32.mrb[0].mxu0
    %380 = vdwg.mxu0
    %381 = vxpose.xlu0.b32.start [1/16] %v319, 128
    %382 = vxpose.xlu0.b32.cont [2/16] %v322, 128
    %383 = vxpose.xlu0.b32.cont [3/16] %v327, 128
    %384 = vxpose.xlu0.b32.cont [4/16] %v330, 128
    %385 = vxpose.xlu0.b32.cont [5/16] %v335, 128
    %386 = vxpose.xlu0.b32.cont [6/16] %v338, 128
    %387 = vxpose.xlu0.b32.cont [7/16] %v343, 128
    %388 = vxpose.xlu0.b32.cont [8/16] %v346, 128
    %389 = vxpose.xlu0.b32.cont [9/16] %v351, 128
    %390 = vxpose.xlu0.b32.cont [10/16] %v354, 128
    %391 = vxpose.xlu0.b32.cont [11/16] %v359, 128
    %392 = vxpose.xlu0.b32.cont [12/16] %v362, 128
    %393 = vxpose.xlu0.b32.cont [13/16] %v367, 128
    %394 = vxpose.xlu0.b32.cont [14/16] %v370, 128
    %395 = vxpose.xlu0.b32.cont [15/16] %v375, 128
    %396 = vxpose.xlu0.b32.end [16/16] %v378, 128
    %v397 = vpop.trf.xlu0
    %v398 = vpop.trf.xlu0
    %v399 = vpop.trf.xlu0
    %v400 = vpop.trf.xlu0
    %v401 = vpop.trf.xlu0
    %v402 = vpop.trf.xlu0
    %v403 = vpop.trf.xlu0
    %v404 = vpop.trf.xlu0
    %v405 = vpop.trf.xlu0
    %v406 = vpop.trf.xlu0
    %v407 = vpop.trf.xlu0
    %v408 = vpop.trf.xlu0
    %v409 = vpop.trf.xlu0
    %v410 = vpop.trf.xlu0
    %v411 = vpop.trf.xlu0
    %v412 = vpop.trf.xlu0
    %413 = vst [vmem:[#allocation2] sm:$0x3] %v397
    %430 = vrot.lane.b32.xlu0 %v319, 126
    %v431 = vpop.permute.xlu0 %430
    %432 = vrot.lane.b32.xlu0 %v322, 126
    %v433 = vpop.permute.xlu0 %432
    %434 = vrot.lane.b32.xlu0 %v327, 126
    %v435 = vpop.permute.xlu0 %434
    %436 = vrot.lane.b32.xlu0 %v330, 126
    %v437 = vpop.permute.xlu0 %436
    %438 = vrot.lane.b32.xlu0 %v335, 126
    %v439 = vpop.permute.xlu0 %438
    %440 = vrot.lane.b32.xlu0 %v338, 126
    %v441 = vpop.permute.xlu0 %440
    %442 = vrot.lane.b32.xlu0 %v343, 126
    %v443 = vpop.permute.xlu0 %442
    %444 = vrot.lane.b32.xlu0 %v346, 126
    %v445 = vpop.permute.xlu0 %444
    %446 = vrot.lane.b32.xlu0 %v351, 126
    %v447 = vpop.permute.xlu0 %446
    %448 = vrot.lane.b32.xlu0 %v354, 126
    %v449 = vpop.permute.xlu0 %448
    %450 = vrot.lane.b32.xlu0 %v359, 126
    %v451 = vpop.permute.xlu0 %450
    %452 = vrot.lane.b32.xlu0 %v362, 126
    %v453 = vpop.permute.xlu0 %452
    %454 = vrot.lane.b32.xlu0 %v367, 126
    %v455 = vpop.permute.xlu0 %454
    %456 = vrot.lane.b32.xlu0 %v370, 126
    %v457 = vpop.permute.xlu0 %456
    %458 = vrot.lane.b32.xlu0 %v375, 126
    %v459 = vpop.permute.xlu0 %458
    %460 = vrot.lane.b32.xlu0 %v378, 126
    %v461 = vpop.permute.xlu0 %460
    %vm478 = vcmask 15360
    %479 = vst.msk [vmem:[%s5] sm:$0xff] %vm478, %v431
    %480 = vst.msk [vmem:[%s5 + $0x8] sm:$0xff] %vm478, %v433
    %481 = vst.msk [vmem:[%s5 + $0x10] sm:$0xff] %vm478, %v435
    %482 = vst.msk [vmem:[%s5 + $0x18] sm:$0xff] %vm478, %v437
    %483 = vst.msk [vmem:[%s5 + $0x20] sm:$0xff] %vm478, %v439
    %484 = vst.msk [vmem:[%s5 + $0x28] sm:$0xff] %vm478, %v441
    %485 = vst.msk [vmem:[%s5 + $0x30] sm:$0xff] %vm478, %v443
    %486 = vst.msk [vmem:[%s5 + $0x38] sm:$0xff] %vm478, %v445
    %487 = vst.msk [vmem:[%s5 + $0x40] sm:$0xff] %vm478, %v447
    %488 = vst.msk [vmem:[%s5 + $0x48] sm:$0xff] %vm478, %v449
    %489 = vst.msk [vmem:[%s5 + $0x50] sm:$0xff] %vm478, %v451
    %490 = vst.msk [vmem:[%s5 + $0x58] sm:$0xff] %vm478, %v453
    %491 = vst.msk [vmem:[%s5 + $0x60] sm:$0xff] %vm478, %v455
    %492 = vst.msk [vmem:[%s5 + $0x68] sm:$0xff] %vm478, %v457
    %493 = vst.msk [vmem:[%s5 + $0x70] sm:$0xff] %vm478, %v459
    %494 = vst.msk [vmem:[%s5 + $0x78] sm:$0xff] %vm478, %v461
    // Predicated region
    $region14: #{tpu_custom_call.1} parent=1 // pred_check
      _
    $region15: #{tpu_custom_call.1} parent=1 // pred_check_branch
      %496 = sbr.rel (0) target = $region17
    $region16: #{tpu_custom_call.1} parent=1 // pred_region
      _
    $region17: #{tpu_custom_call.1} parent=1 // pred_fallthru
      _
    // Predicated region
    $region18: #{tpu_custom_call.1} parent=1 // pred_check
      _
    $region19: #{tpu_custom_call.1} parent=1 // pred_check_branch
      %498 = sbr.rel (0) target = $region21
    $region20: #{tpu_custom_call.1} parent=1 // pred_region
      %s500 = ssub.s32 32, 32
      %501 = vsyncadd [#allocation3], %s500
      %s503 = sshll.u32 [#allocation2], 4
      %s504 = int_to_ptr.vmem [resolvable:$true] %s503
      %506 = dma.vmem_to_hbm [thread:$0]  %s504, 32, %s4, [#allocation3]
    $region21: #{tpu_custom_call.1} parent=1 // pred_fallthru
      _
    // Predicated region
    $region22: #{tpu_custom_call.1} parent=1 // pred_check
      _
    $region23: #{tpu_custom_call.1} parent=1 // pred_check_branch
      %508 = sbr.rel (0) target = $region25
    $region24: #{tpu_custom_call.1} parent=1 // pred_region
      _
    $region25: #{tpu_custom_call.1} parent=1 // pred_fallthru
      _
    // Predicated region
    $region26: #{tpu_custom_call.1} parent=1 // pred_check
      _
    $region27: #{tpu_custom_call.1} parent=1 // pred_check_branch
      %510 = sbr.rel (0) target = $region29
    $region28: #{tpu_custom_call.1} parent=1 // pred_region
      _
    $region29: #{tpu_custom_call.1} parent=1 // pred_fallthru
      _
    // Predicated region
    $region30: #{tpu_custom_call.1} parent=1 // pred_check
      _
    $region31: #{tpu_custom_call.1} parent=1 // pred_check_branch
      %512 = sbr.rel (0) target = $region33
    $region32: #{tpu_custom_call.1} parent=1 // pred_region
      %513 = dma.done [#allocation3], 32
    $region33: #{tpu_custom_call.1} parent=1 // pred_fallthru
      _
    // Predicated region
    $region34: #{tpu_custom_call.1} parent=1 // pred_check
      _
    $region35: #{tpu_custom_call.1} parent=1 // pred_check_branch
      %515 = sbr.rel (0) target = $region37
    $region36: #{tpu_custom_call.1} parent=1 // pred_region
      _
    $region37: #{tpu_custom_call.1} parent=1 // pred_fallthru
      _
    %516 = vsyncpa [#allocation3], 1

</llo_original>
